<compile_context>
chip_gen: v7x
topology: tpu7x:2x2x1
jax: 0.10.0
libtpu: 0.0.40
codegen_flags: <defaults>
</compile_context>

<pallas_src>
import jax
import jax.numpy as jnp
import numpy as np
from jax.experimental import pallas as pl
from jax.experimental.pallas import tpu as pltpu  # noqa: F401  (TPU backend)

# Constant blob baked into the PyTorch module's forward, shape (1, 1, 2, 2).
_CONST_BLOB = np.array([[[[0.1, -0.2], [-0.3, 0.4]]]], dtype=np.float32)


def _make_sigmoid_concat_kernel(c_rows: int):
    """Kernel: rows [0, c_rows) of the output get sigmoid(x); row c_rows gets
    the constant blob.  c_rows is a static Python int (closure)."""

    def kernel(x_ref, const_ref, o_ref):
        v = x_ref[...]                                   # (C, 4) f32
        # torch.sigmoid == 1 / (1 + exp(-x)); exp runs on the EUP.
        o_ref[pl.ds(0, c_rows), :] = 1.0 / (1.0 + jnp.exp(-v))
        # Extra channel = constant blob (fused concat along channels).
        o_ref[pl.ds(c_rows, 1), :] = const_ref[...]

    return kernel


def concat_const_blob_forward(x):
    """JAX/Pallas equivalent of ConcatConstBlob.forward.

    x: float32 array of shape (1, C, 2, 2) (NCHW).
    Returns (1, C + 1, 2, 2): channels [0, C) = sigmoid(x), channel C = blob.
    """
    n, c, h, w = x.shape
    if n != 1 or (h, w) != (2, 2):
        raise ValueError(
            f"ConcatConstBlob requires x of shape (1, C, 2, 2); got {x.shape}")
    hw = h * w
    out_rows = c + 1

    # Metadata-only 2D views: x is contiguous NCHW with N == 1, so each
    # channel is a contiguous row of H*W elements and the concat along the
    # channel axis is just "one extra row" of the 2D output.
    x2d = x.reshape(c, hw)
    const2d = jnp.asarray(_CONST_BLOB, dtype=x.dtype).reshape(1, hw)

    itemsize = jnp.dtype(x.dtype).itemsize
    cost = pl.CostEstimate(
        flops=3 * c * hw,            # negate, add, divide per element
        transcendentals=c * hw,      # exp per element
        bytes_accessed=(c * hw + hw + out_rows * hw) * itemsize,
    )

    out2d = pl.pallas_call(
        _make_sigmoid_concat_kernel(c),
        out_shape=jax.ShapeDtypeStruct((out_rows, hw), x.dtype),
        grid=(1,),
        in_specs=[
            pl.BlockSpec((c, hw), lambda i: (0, 0)),      # full-array block
            pl.BlockSpec((1, hw), lambda i: (0, 0)),      # constant blob row
        ],
        out_specs=pl.BlockSpec((out_rows, hw), lambda i: (0, 0)),
        cost_estimate=cost,
    )(x2d, const2d)

    return out2d.reshape(1, out_rows, h, w)


if __name__ == "__main__":
    key = jax.random.PRNGKey(0)
    # Module forward implies N=1, H=W=2 (concat with a (1,1,2,2) constant).
    x = jax.random.normal(key, (1, 4, 2, 2), dtype=jnp.float32)

    forward = jax.jit(concat_const_blob_forward)
    out = forward(x)
    out = jax.block_until_ready(out)

    # Reference check against plain JAX.
    ref = jnp.concatenate(
        [jax.nn.sigmoid(x), jnp.asarray(_CONST_BLOB, dtype=x.dtype)], axis=1)
    assert out.shape == (1, 5, 2, 2), out.shape
    assert out.dtype == x.dtype
    assert jnp.allclose(out, ref, atol=1e-6, rtol=1e-6), "mismatch vs reference"

    print("KERNEL_OK")
</pallas_src>

<mosaic_0001>
module attributes {stable_mosaic.version = 11 : i64} {
  func.func @kernel(%arg0: i32, %arg1: memref<4x4xf32, #tpu.memory_space<vmem>>, %arg2: memref<1x4xf32, #tpu.memory_space<vmem>>, %arg3: memref<5x4xf32, #tpu.memory_space<vmem>>) attributes {dimension_semantics = [#tpu.dimension_semantics<arbitrary>], iteration_bounds = array<i64: 1>, scalar_prefetch = 0 : i64, scratch_operands = 0 : i64, tpu.core_type = #tpu.core_type<tc>, window_params = [{pipeline_mode = #tpu.pipeline_mode<synchronous>, transform_indices = @transform_0, window_bounds = array<i64: 4, 4>}, {pipeline_mode = #tpu.pipeline_mode<synchronous>, transform_indices = @transform_1, window_bounds = array<i64: 1, 4>}, {pipeline_mode = #tpu.pipeline_mode<synchronous>, transform_indices = @transform_2, window_bounds = array<i64: 5, 4>}]} {
    %c0 = arith.constant 0 : index
    %c0_0 = arith.constant 0 : index
    %0 = vector.load %arg1[%c0, %c0_0] : memref<4x4xf32, #tpu.memory_space<vmem>>, vector<4x4xf32>
    %cst = arith.constant 0.000000e+00 : f32
    %1 = vector.broadcast %cst : f32 to vector<4x4xf32>
    %2 = arith.subf %1, %0 : vector<4x4xf32>
    %3 = math.exp %2 : vector<4x4xf32>
    %cst_1 = arith.constant 1.000000e+00 : f32
    %4 = vector.broadcast %cst_1 : f32 to vector<4x4xf32>
    %5 = arith.addf %4, %3 : vector<4x4xf32>
    %cst_2 = arith.constant 1.000000e+00 : f32
    %6 = vector.broadcast %cst_2 : f32 to vector<4x4xf32>
    %7 = arith.divf %6, %5 : vector<4x4xf32>
    %c0_3 = arith.constant 0 : index
    %c0_4 = arith.constant 0 : index
    %8 = vector.load %arg3[%c0_3, %c0_4] : memref<5x4xf32, #tpu.memory_space<vmem>>, vector<4x4xf32>
    tpu.vector_store %arg3[%c0_3, %c0_4], %7 {strides = array<i32>} : memref<5x4xf32, #tpu.memory_space<vmem>>, vector<4x4xf32>,
    %c0_5 = arith.constant 0 : index
    %c0_6 = arith.constant 0 : index
    %9 = vector.load %arg2[%c0_5, %c0_6] : memref<1x4xf32, #tpu.memory_space<vmem>>, vector<1x4xf32>
    %c4 = arith.constant 4 : index
    %c0_7 = arith.constant 0 : index
    %10 = vector.load %arg3[%c4, %c0_7] : memref<5x4xf32, #tpu.memory_space<vmem>>, vector<1x4xf32>
    tpu.vector_store %arg3[%c4, %c0_7], %9 {strides = array<i32>} : memref<5x4xf32, #tpu.memory_space<vmem>>, vector<1x4xf32>,
    return
  }
  func.func @transform_0(%arg0: i32) -> (i32, i32) {
    %c0_i32 = arith.constant 0 : i32
    %c0_i32_0 = arith.constant 0 : i32
    %c0_i32_1 = arith.constant 0 : i32
    return %c0_i32, %c0_i32_0 : i32, i32
  }
  func.func @transform_1(%arg0: i32) -> (i32, i32) {
    %c0_i32 = arith.constant 0 : i32
    %c0_i32_0 = arith.constant 0 : i32
    %c0_i32_1 = arith.constant 0 : i32
    return %c0_i32, %c0_i32_0 : i32, i32
  }
  func.func @transform_2(%arg0: i32) -> (i32, i32) {
    %c0_i32 = arith.constant 0 : i32
    %c0_i32_0 = arith.constant 0 : i32
    %c0_i32_1 = arith.constant 0 : i32
    return %c0_i32, %c0_i32_0 : i32, i32
  }
}

</mosaic_0001>

<llo_original>
// kernel: concat_const_blob_forward.1
$region0: #{concat_const_blob_forward.1}
  #allocation0 [shape = 'u32[]', space=smem, size = 0x4, offset = 0x4, fixed_abs, tag = 'smem constant byte address 0x4 - core index']
  #allocation1 [shape = 'u32[144,128]{1,0:T(1,128)}', space=vmem, size = 0x12000, scoped, tag = 'internal scratch']
  %s0 = inlined_call_operand.vmem [shape: f32[4,4], index: 0, kind: input, shape index: {}]
  %s1 = inlined_call_operand.vmem [shape: f32[1,4], index: 1, kind: input, shape index: {}]
  %s2 = inlined_call_operand.vmem [shape: f32[5,4], index: 2, kind: output, shape index: {}]
  %s3 = sld [smem:[#allocation0]]
  $region18: #{concat_const_blob_forward.1} parent=0
    _
  %s5 = ssub.s32 1, %s3
  %s6 = scalar_select 0, %s5, %s3
  // Predicated region
  $region2: #{concat_const_blob_forward.1} parent=0 // pred_check
    _
  $region3: #{concat_const_blob_forward.1} parent=0 // pred_check_branch
    %8 = sbr.rel (0) target = $region5
  $region4: #{concat_const_blob_forward.1} parent=0 // pred_region
    _
  $region5: #{concat_const_blob_forward.1} parent=0 // pred_fallthru
    _
  // Predicated region
  $region6: #{concat_const_blob_forward.1} parent=0 // pred_check
    _
  $region7: #{concat_const_blob_forward.1} parent=0 // pred_check_branch
    %10 = sbr.rel (0) target = $region9
  $region8: #{concat_const_blob_forward.1} parent=0 // pred_region
    _
  $region9: #{concat_const_blob_forward.1} parent=0 // pred_fallthru
    _
  %v11 = vld [vmem:[%s0] sm:$0xf]
  %v12 = vsub.f32 0.0, %v11
  %v13 = vmul.f32 %v12, 1.442695
  %v14 = vpow.pop %v13
  %v15 = vadd.f32 %v14, 1.0
  %v16 = vrcp.pop %v15
  %v17 = vmul.f32 1.0, %v16
  %vm18 = vcmask 27648
  %19 = vst.msk [vmem:[%s2] sm:$0xf] %vm18, %v17
  %v20 = vld [vmem:[%s1] sm:$0x1]
  %vm21 = vcmask 24576
  %22 = vst.msk [vmem:[%s2 + $0x4] sm:$0x1] %vm21, %v20
  // Predicated region
  $region10: #{concat_const_blob_forward.1} parent=0 // pred_check
    _
  $region11: #{concat_const_blob_forward.1} parent=0 // pred_check_branch
    %24 = sbr.rel (0) target = $region13
  $region12: #{concat_const_blob_forward.1} parent=0 // pred_region
    _
  $region13: #{concat_const_blob_forward.1} parent=0 // pred_fallthru
    _
  // Predicated region
  $region14: #{concat_const_blob_forward.1} parent=0 // pred_check
    _
  $region15: #{concat_const_blob_forward.1} parent=0 // pred_check_branch
    %26 = sbr.rel (0) target = $region17
  $region16: #{concat_const_blob_forward.1} parent=0 // pred_region
    _
  $region17: #{concat_const_blob_forward.1} parent=0 // pred_fallthru
    _

</llo_original>
